<compile_context>
chip_gen: v6e
topology: v6e:2x2x1
jax: 0.10.0
libtpu: 0.0.40
codegen_flags: <defaults>
</compile_context>

<pallas_src>
import functools
import math

import jax
import jax.numpy as jnp
from jax.experimental import pallas as pl
from jax.experimental.pallas import tpu as pltpu


def _round_up(x, m):
    return (x + m - 1) // m * m


def _mapping_kernel(x_ref, w_ref, b_ref, o_ref, *, n_layers, leak):
    """One grid step == one batch tile through ALL layers.

    x_ref : (Bt, Dp)        f32   input latents for this batch tile
    w_ref : (L, Dp, Dp)     bf16  scale-folded weight stack, VMEM-resident
    b_ref : (L, 1, Dp)      f32   scale-folded bias stack,   VMEM-resident
    o_ref : (Bt, Dp)        f32   output tile
    """
    act = x_ref[...]                                   # f32 activations end-to-end
    for l in range(n_layers):                          # static, fully unrolled
        w = w_ref[l].astype(jnp.float32)               # bf16 -> f32 upcast (cheap VPU)
        y = jnp.dot(act, w, preferred_element_type=jnp.float32)
        y = y + b_ref[l]                               # (1, Dp) broadcasts over rows
        act = jnp.where(y >= 0.0, y, leak * y)         # LeakyReLU
    o_ref[...] = act.astype(o_ref.dtype)


def init_mapping_params(key, dim_in, dim_latent, n_layers, lr_mul=0.01):
    """Raw params matching ConstrainedLayer init: W ~ N(0,1)/lrMul, b = 0.

    Weights are stored transposed as (in_dim, out_dim) for a plain x @ W matmul.
    """
    params = []
    in_dim = dim_in
    for _ in range(n_layers):
        key, sub = jax.random.split(key)
        w_t = jax.random.normal(sub, (in_dim, dim_latent), dtype=jnp.float32) / lr_mul
        b = jnp.zeros((dim_latent,), dtype=jnp.float32)
        params.append((w_t, b))
        in_dim = dim_latent
    return params


def prepare_mapping_params(params, *, lr_mul=0.01, param_dtype=jnp.bfloat16):
    """Fold the equalized-lr scale into the params, pad to a common lane-aligned
    square dim, and stack so the fused kernel holds all layers VMEM-resident.

    Returns (w_stack (L, Dp, Dp) param_dtype, b_stack (L, 1, Dp) f32).
    """
    dims = [w.shape for (w, _) in params]
    d_pad = _round_up(max(max(i, o) for i, o in dims), 128)
    w_list, b_list = [], []
    for (w_t, b) in params:
        in_dim, out_dim = w_t.shape
        scale = math.sqrt(2.0 / in_dim) * lr_mul       # He constant * lrMul
        w_p = jnp.zeros((d_pad, d_pad), jnp.float32).at[:in_dim, :out_dim].set(w_t * scale)
        b_p = jnp.zeros((d_pad,), jnp.float32).at[:out_dim].set(b * scale)
        w_list.append(w_p.astype(param_dtype))
        b_list.append(b_p)
    w_stack = jnp.stack(w_list, axis=0)                # (L, Dp, Dp)
    b_stack = jnp.stack(b_list, axis=0)[:, None, :]    # (L, 1, Dp)
    return w_stack, b_stack


@functools.partial(jax.jit, static_argnames=("dim_latent", "leak"))
def mapping_layer_forward(x, w_stack, b_stack, *, dim_latent, leak=0.2):
    """Fused forward pass over all mapping layers in one pallas_call.

    x       : (B, dim_in) f32
    w_stack : (L, Dp, Dp) bf16/f32 (scale folded, zero padded)
    b_stack : (L, 1, Dp)  f32      (scale folded, zero padded)
    returns : (B, dim_latent) f32
    """
    B, dim_in = x.shape
    n_layers, d_pad, _ = w_stack.shape

    # Batch tiling: one tile for small batches; 256-row tiles (grid marked
    # "parallel" -> megacore on v7x) for large batches.
    b_pad = _round_up(B, 8)
    if b_pad > 256:
        b_pad = _round_up(B, 256)
        b_tile = 256
    else:
        b_tile = b_pad
    num_tiles = b_pad // b_tile

    # Zero-pad x; padded rows/cols stay zero through every layer because the
    # padded weight rows/cols and bias entries are zero and LeakyReLU(0) == 0.
    x_p = jnp.zeros((b_pad, d_pad), jnp.float32).at[:B, :dim_in].set(x)

    # VMEM estimate (double-buffered inputs + output tiles); raise scoped limit
    # only if needed, capped at v7x's 64 MiB physical.
    est = (2 * w_stack.size * w_stack.dtype.itemsize
           + 2 * b_stack.size * 4
           + 4 * b_tile * d_pad * 4
           + (1 << 20))
    cp_kwargs = dict(dimension_semantics=("parallel",))
    if est > (32 << 20):
        cp_kwargs["vmem_limit_bytes"] = min(est, 64 << 20)

    kernel = functools.partial(_mapping_kernel, n_layers=int(n_layers), leak=float(leak))
    out = pl.pallas_call(
        kernel,
        out_shape=jax.ShapeDtypeStruct((b_pad, d_pad), jnp.float32),
        grid=(num_tiles,),
        in_specs=[
            pl.BlockSpec((b_tile, d_pad), lambda i: (i, 0)),              # x batch tile
            pl.BlockSpec((n_layers, d_pad, d_pad), lambda i: (0, 0, 0)),  # full weight stack, resident
            pl.BlockSpec((n_layers, 1, d_pad), lambda i: (0, 0, 0)),      # full bias stack, resident
        ],
        out_specs=pl.BlockSpec((b_tile, d_pad), lambda i: (i, 0)),
        compiler_params=pltpu.CompilerParams(**cp_kwargs),
    )(x_p, w_stack, b_stack)

    return out[:B, :dim_latent]


def mapping_layer_reference(x, params, *, lr_mul=0.01, leak=0.2,
                            param_dtype=jnp.bfloat16):
    """Pure-JAX reference mirroring the kernel's precision policy exactly:
    weights rounded to bf16, activations / accumulate / bias / LeakyReLU in f32."""
    y = x
    for (w_t, b) in params:
        in_dim = w_t.shape[0]
        scale = math.sqrt(2.0 / in_dim) * lr_mul
        w_eff = (w_t * scale).astype(param_dtype).astype(jnp.float32)
        b_eff = (b * scale).astype(jnp.float32)
        y = jnp.dot(y, w_eff, preferred_element_type=jnp.float32) + b_eff
        y = jnp.where(y >= 0.0, y, leak * y)
    return y


if __name__ == "__main__":
    # Small but lane/sublane-aligned shapes (StyleGAN's real mapping net is 512-dim,
    # 8 layers, which keeps the whole bf16 stack at 4 MiB — trivially VMEM-resident).
    BATCH, DIM_IN, DIM_LATENT, N_LAYERS = 8, 256, 256, 4
    LR_MUL, LEAK = 0.01, 0.2

    key = jax.random.PRNGKey(0)
    key_x, key_p = jax.random.split(key)
    x = jax.random.normal(key_x, (BATCH, DIM_IN), dtype=jnp.float32)

    params = init_mapping_params(key_p, DIM_IN, DIM_LATENT, N_LAYERS, lr_mul=LR_MUL)
    w_stack, b_stack = prepare_mapping_params(params, lr_mul=LR_MUL,
                                              param_dtype=jnp.bfloat16)

    out = mapping_layer_forward(x, w_stack, b_stack,
                                dim_latent=DIM_LATENT, leak=LEAK)
    out = jax.block_until_ready(out)

    ref = mapping_layer_reference(x, params, lr_mul=LR_MUL, leak=LEAK,
                                  param_dtype=jnp.bfloat16)
    assert out.shape == (BATCH, DIM_LATENT)
    assert jnp.allclose(out, ref, atol=1e-3, rtol=1e-3), float(
        jnp.max(jnp.abs(out - ref)))

    print("KERNEL_OK")
</pallas_src>

<mosaic_0001>
module attributes {stable_mosaic.version = 11 : i64} {
  func.func @_mapping_kernel(%arg0: i32, %arg1: memref<8x256xf32, #tpu.memory_space<vmem>>, %arg2: memref<4x256x256xbf16, #tpu.memory_space<vmem>>, %arg3: memref<4x1x256xf32, #tpu.memory_space<vmem>>, %arg4: memref<8x256xf32, #tpu.memory_space<vmem>>) attributes {dimension_semantics = [#tpu.dimension_semantics<parallel>], iteration_bounds = array<i64: 1>, scalar_prefetch = 0 : i64, scratch_operands = 0 : i64, tpu.core_type = #tpu.core_type<tc>, window_params = [{transform_indices = @transform_0, window_bounds = array<i64: 8, 256>}, {pipeline_mode = #tpu.pipeline_mode<synchronous>, transform_indices = @transform_1, window_bounds = array<i64: 4, 256, 256>}, {pipeline_mode = #tpu.pipeline_mode<synchronous>, transform_indices = @transform_2, window_bounds = array<i64: 4, 1, 256>}, {transform_indices = @transform_3, window_bounds = array<i64: 8, 256>}]} {
    %c0 = arith.constant 0 : index
    %c0_0 = arith.constant 0 : index
    %0 = vector.load %arg1[%c0, %c0_0] : memref<8x256xf32, #tpu.memory_space<vmem>>, vector<8x256xf32>
    %c0_1 = arith.constant 0 : index
    %c0_2 = arith.constant 0 : index
    %c0_3 = arith.constant 0 : index
    %1 = vector.load %arg2[%c0_1, %c0_2, %c0_3] : memref<4x256x256xbf16, #tpu.memory_space<vmem>>, vector<1x256x256xbf16>
    %2 = vector.shape_cast %1 : vector<1x256x256xbf16> to vector<256x256xbf16>
    %3 = arith.extf %2 : vector<256x256xbf16> to vector<256x256xf32>
    %cst = arith.constant dense<0.000000e+00> : vector<8x256xf32>
    %4 = tpu.matmul %0, %3, %cst {dimension_numbers = #tpu.dot_dimension_numbers<[1], [0], [0], [1], [0, 0, 1, 1], [], []>} : vector<8x256xf32>, vector<256x256xf32>, vector<8x256xf32> -> vector<8x256xf32>
    %c0_4 = arith.constant 0 : index
    %c0_5 = arith.constant 0 : index
    %c0_6 = arith.constant 0 : index
    %5 = vector.load %arg3[%c0_4, %c0_5, %c0_6] : memref<4x1x256xf32, #tpu.memory_space<vmem>>, vector<1x1x256xf32>
    %6 = vector.shape_cast %5 : vector<1x1x256xf32> to vector<1x256xf32>
    %7 = vector.broadcast %6 : vector<1x256xf32> to vector<8x256xf32>
    %8 = arith.addf %4, %7 : vector<8x256xf32>
    %cst_7 = arith.constant 0.000000e+00 : f32
    %9 = vector.broadcast %cst_7 : f32 to vector<8x256xf32>
    %10 = arith.cmpf oge, %8, %9 : vector<8x256xf32>
    %cst_8 = arith.constant 2.000000e-01 : f32
    %11 = vector.broadcast %cst_8 : f32 to vector<8x256xf32>
    %12 = arith.mulf %11, %8 : vector<8x256xf32>
    %13 = arith.select %10, %8, %12 : vector<8x256xi1>, vector<8x256xf32>
    %c1 = arith.constant 1 : index
    %c0_9 = arith.constant 0 : index
    %c0_10 = arith.constant 0 : index
    %14 = vector.load %arg2[%c1, %c0_9, %c0_10] : memref<4x256x256xbf16, #tpu.memory_space<vmem>>, vector<1x256x256xbf16>
    %15 = vector.shape_cast %14 : vector<1x256x256xbf16> to vector<256x256xbf16>
    %16 = arith.extf %15 : vector<256x256xbf16> to vector<256x256xf32>
    %cst_11 = arith.constant dense<0.000000e+00> : vector<8x256xf32>
    %17 = tpu.matmul %13, %16, %cst_11 {dimension_numbers = #tpu.dot_dimension_numbers<[1], [0], [0], [1], [0, 0, 1, 1], [], []>} : vector<8x256xf32>, vector<256x256xf32>, vector<8x256xf32> -> vector<8x256xf32>
    %c1_12 = arith.constant 1 : index
    %c0_13 = arith.constant 0 : index
    %c0_14 = arith.constant 0 : index
    %18 = vector.load %arg3[%c1_12, %c0_13, %c0_14] : memref<4x1x256xf32, #tpu.memory_space<vmem>>, vector<1x1x256xf32>
    %19 = vector.shape_cast %18 : vector<1x1x256xf32> to vector<1x256xf32>
    %20 = vector.broadcast %19 : vector<1x256xf32> to vector<8x256xf32>
    %21 = arith.addf %17, %20 : vector<8x256xf32>
    %cst_15 = arith.constant 0.000000e+00 : f32
    %22 = vector.broadcast %cst_15 : f32 to vector<8x256xf32>
    %23 = arith.cmpf oge, %21, %22 : vector<8x256xf32>
    %cst_16 = arith.constant 2.000000e-01 : f32
    %24 = vector.broadcast %cst_16 : f32 to vector<8x256xf32>
    %25 = arith.mulf %24, %21 : vector<8x256xf32>
    %26 = arith.select %23, %21, %25 : vector<8x256xi1>, vector<8x256xf32>
    %c2 = arith.constant 2 : index
    %c0_17 = arith.constant 0 : index
    %c0_18 = arith.constant 0 : index
    %27 = vector.load %arg2[%c2, %c0_17, %c0_18] : memref<4x256x256xbf16, #tpu.memory_space<vmem>>, vector<1x256x256xbf16>
    %28 = vector.shape_cast %27 : vector<1x256x256xbf16> to vector<256x256xbf16>
    %29 = arith.extf %28 : vector<256x256xbf16> to vector<256x256xf32>
    %cst_19 = arith.constant dense<0.000000e+00> : vector<8x256xf32>
    %30 = tpu.matmul %26, %29, %cst_19 {dimension_numbers = #tpu.dot_dimension_numbers<[1], [0], [0], [1], [0, 0, 1, 1], [], []>} : vector<8x256xf32>, vector<256x256xf32>, vector<8x256xf32> -> vector<8x256xf32>
    %c2_20 = arith.constant 2 : index
    %c0_21 = arith.constant 0 : index
    %c0_22 = arith.constant 0 : index
    %31 = vector.load %arg3[%c2_20, %c0_21, %c0_22] : memref<4x1x256xf32, #tpu.memory_space<vmem>>, vector<1x1x256xf32>
    %32 = vector.shape_cast %31 : vector<1x1x256xf32> to vector<1x256xf32>
    %33 = vector.broadcast %32 : vector<1x256xf32> to vector<8x256xf32>
    %34 = arith.addf %30, %33 : vector<8x256xf32>
    %cst_23 = arith.constant 0.000000e+00 : f32
    %35 = vector.broadcast %cst_23 : f32 to vector<8x256xf32>
    %36 = arith.cmpf oge, %34, %35 : vector<8x256xf32>
    %cst_24 = arith.constant 2.000000e-01 : f32
    %37 = vector.broadcast %cst_24 : f32 to vector<8x256xf32>
    %38 = arith.mulf %37, %34 : vector<8x256xf32>
    %39 = arith.select %36, %34, %38 : vector<8x256xi1>, vector<8x256xf32>
    %c3 = arith.constant 3 : index
    %c0_25 = arith.constant 0 : index
    %c0_26 = arith.constant 0 : index
    %40 = vector.load %arg2[%c3, %c0_25, %c0_26] : memref<4x256x256xbf16, #tpu.memory_space<vmem>>, vector<1x256x256xbf16>
    %41 = vector.shape_cast %40 : vector<1x256x256xbf16> to vector<256x256xbf16>
    %42 = arith.extf %41 : vector<256x256xbf16> to vector<256x256xf32>
    %cst_27 = arith.constant dense<0.000000e+00> : vector<8x256xf32>
    %43 = tpu.matmul %39, %42, %cst_27 {dimension_numbers = #tpu.dot_dimension_numbers<[1], [0], [0], [1], [0, 0, 1, 1], [], []>} : vector<8x256xf32>, vector<256x256xf32>, vector<8x256xf32> -> vector<8x256xf32>
    %c3_28 = arith.constant 3 : index
    %c0_29 = arith.constant 0 : index
    %c0_30 = arith.constant 0 : index
    %44 = vector.load %arg3[%c3_28, %c0_29, %c0_30] : memref<4x1x256xf32, #tpu.memory_space<vmem>>, vector<1x1x256xf32>
    %45 = vector.shape_cast %44 : vector<1x1x256xf32> to vector<1x256xf32>
    %46 = vector.broadcast %45 : vector<1x256xf32> to vector<8x256xf32>
    %47 = arith.addf %43, %46 : vector<8x256xf32>
    %cst_31 = arith.constant 0.000000e+00 : f32
    %48 = vector.broadcast %cst_31 : f32 to vector<8x256xf32>
    %49 = arith.cmpf oge, %47, %48 : vector<8x256xf32>
    %cst_32 = arith.constant 2.000000e-01 : f32
    %50 = vector.broadcast %cst_32 : f32 to vector<8x256xf32>
    %51 = arith.mulf %50, %47 : vector<8x256xf32>
    %52 = arith.select %49, %47, %51 : vector<8x256xi1>, vector<8x256xf32>
    %c0_33 = arith.constant 0 : index
    %c0_34 = arith.constant 0 : index
    %53 = vector.load %arg4[%c0_33, %c0_34] : memref<8x256xf32, #tpu.memory_space<vmem>>, vector<8x256xf32>
    tpu.vector_store %arg4[%c0_33, %c0_34], %52 {strides = array<i32>} : memref<8x256xf32, #tpu.memory_space<vmem>>, vector<8x256xf32>,
    return
  }
  func.func @transform_0(%arg0: i32) -> (i32, i32) {
    %c0_i32 = arith.constant 0 : i32
    %c0_i32_0 = arith.constant 0 : i32
    return %arg0, %c0_i32 : i32, i32
  }
  func.func @transform_1(%arg0: i32) -> (i32, i32, i32) {
    %c0_i32 = arith.constant 0 : i32
    %c0_i32_0 = arith.constant 0 : i32
    %c0_i32_1 = arith.constant 0 : i32
    %c0_i32_2 = arith.constant 0 : i32
    return %c0_i32, %c0_i32_0, %c0_i32_1 : i32, i32, i32
  }
  func.func @transform_2(%arg0: i32) -> (i32, i32, i32) {
    %c0_i32 = arith.constant 0 : i32
    %c0_i32_0 = arith.constant 0 : i32
    %c0_i32_1 = arith.constant 0 : i32
    %c0_i32_2 = arith.constant 0 : i32
    return %c0_i32, %c0_i32_0, %c0_i32_1 : i32, i32, i32
  }
  func.func @transform_3(%arg0: i32) -> (i32, i32) {
    %c0_i32 = arith.constant 0 : i32
    %c0_i32_0 = arith.constant 0 : i32
    return %arg0, %c0_i32 : i32, i32
  }
}

</mosaic_0001>

<llo_original>
// kernel: mapping_layer_forward.1
$region0: #{mapping_layer_forward.1}
  #allocation0 [shape = 'u32[]', space=smem, size = 0x4, offset = 0x4, fixed_abs, tag = 'smem constant byte address 0x4 - core index']
  #allocation1 [shape = 'u32[144,128]{1,0:T(1,128)}', space=vmem, size = 0x12000, scoped, tag = 'internal scratch']
  %s0 = inlined_call_operand.hbm [shape: f32[8,256], index: 0, kind: input, shape index: {}]
  %s1 = inlined_call_operand.hbm [shape: bf16[4,256,256], index: 1, kind: input, shape index: {}]
  %s2 = inlined_call_operand.hbm [shape: f32[4,1,256], index: 2, kind: input, shape index: {}]
  %s3 = inlined_call_operand.hbm [shape: f32[8,256], index: 3, kind: output, shape index: {}]
  %s4 = sld [smem:[#allocation0]]
  $region34: #{mapping_layer_forward.1} parent=0
    _
  %s6 = ssub.s32 1, %s4
  %s7 = scalar_select 0, %s6, %s4
  $region1: #{mapping_layer_forward.1} parent=0
    #allocation2 [shape = 'u8[8192]{0}', space=vmem, size = 0x2000, scoped, tag = 'input window, operand 0, single buffered']
    #allocation3 [shape = 's32[1]{0}', space=sflag, size = 0x4, scoped, tag = 'scoped memory for mapping_layer_forward.1']
    #allocation4 [shape = 's32[1]{0}', space=sflag, size = 0x4, scoped, tag = 'scoped memory for mapping_layer_forward.1']
    #allocation5 [shape = 'u8[524288]{0}', space=vmem, size = 0x80000, scoped, tag = 'input window, operand 1, single buffered']
    #allocation6 [shape = 's32[1]{0}', space=sflag, size = 0x4, scoped, tag = 'scoped memory for mapping_layer_forward.1']
    #allocation7 [shape = 'u8[4096]{0}', space=vmem, size = 0x1000, scoped, tag = 'input window, operand 2, single buffered']
    #allocation8 [shape = 'u8[8192]{0}', space=vmem, size = 0x2000, scoped, tag = 'output window, operand 0, single buffered']
    %8 = vsyncpa [#allocation3], 0
    %9 = vsyncpa [#allocation6], 0
    %10 = vsyncpa [#allocation4], 0
    // Predicated region
    $region2: #{mapping_layer_forward.1} parent=1 // pred_check
      _
    $region3: #{mapping_layer_forward.1} parent=1 // pred_check_branch
      %12 = sbr.rel (0) target = $region5
    $region4: #{mapping_layer_forward.1} parent=1 // pred_region
      %s14 = ssub.s32 256, 256
      %15 = vsyncadd [#allocation3], %s14
      %s17 = sshll.u32 [#allocation2], 4
      %s18 = int_to_ptr.vmem [resolvable:$true] %s17
      %20 = dma.hbm_to_vmem [thread:$0]  %s0, 256, %s18, [#allocation3]
    $region5: #{mapping_layer_forward.1} parent=1 // pred_fallthru
      _
    // Predicated region
    $region6: #{mapping_layer_forward.1} parent=1 // pred_check
      _
    $region7: #{mapping_layer_forward.1} parent=1 // pred_check_branch
      %22 = sbr.rel (0) target = $region9
    $region8: #{mapping_layer_forward.1} parent=1 // pred_region
      %s24 = ssub.s32 16384, 16384
      %25 = vsyncadd [#allocation6], %s24
      %s26 = sshll.u32 [#allocation5], 4
      %s27 = int_to_ptr.vmem [resolvable:$true] %s26
      %32 = dma.hbm_to_vmem [thread:$0]  %s1, 16384, %s27, [#allocation6], 128, 128, 8
    $region9: #{mapping_layer_forward.1} parent=1 // pred_fallthru
      _
    // Predicated region
    $region10: #{mapping_layer_forward.1} parent=1 // pred_check
      _
    $region11: #{mapping_layer_forward.1} parent=1 // pred_check_branch
      %34 = sbr.rel (0) target = $region13
    $region12: #{mapping_layer_forward.1} parent=1 // pred_region
      %s36 = ssub.s32 128, 128
      %37 = vsyncadd [#allocation6], %s36
      %s38 = sshll.u32 [#allocation7], 4
      %s39 = int_to_ptr.vmem [resolvable:$true] %s38
      %44 = dma.hbm_to_vmem [thread:$0]  %s2, 128, %s39, [#allocation6], 32, 32, 2
    $region13: #{mapping_layer_forward.1} parent=1 // pred_fallthru
      _
    // Predicated region
    $region14: #{mapping_layer_forward.1} parent=1 // pred_check
      _
    $region15: #{mapping_layer_forward.1} parent=1 // pred_check_branch
      %46 = sbr.rel (0) target = $region17
    $region16: #{mapping_layer_forward.1} parent=1 // pred_region
      %47 = dma.done [#allocation3], 256
    $region17: #{mapping_layer_forward.1} parent=1 // pred_fallthru
      _
    // Predicated region
    $region18: #{mapping_layer_forward.1} parent=1 // pred_check
      _
    $region19: #{mapping_layer_forward.1} parent=1 // pred_check_branch
      %49 = sbr.rel (0) target = $region21
    $region20: #{mapping_layer_forward.1} parent=1 // pred_region
      %50 = dma.done [#allocation6], 16384
    $region21: #{mapping_layer_forward.1} parent=1 // pred_fallthru
      _
    // Predicated region
    $region22: #{mapping_layer_forward.1} parent=1 // pred_check
      _
    $region23: #{mapping_layer_forward.1} parent=1 // pred_check_branch
      %52 = sbr.rel (0) target = $region25
    $region24: #{mapping_layer_forward.1} parent=1 // pred_region
      %53 = dma.done [#allocation6], 128
    $region25: #{mapping_layer_forward.1} parent=1 // pred_fallthru
      _
    %v54 = vld [vmem:[#allocation2] sm:$0xff]
    %v55 = vld [vmem:[#allocation2 + $0x8] sm:$0xff]
    %v56 = vld [vmem:[#allocation5] sm:$0xff]
    %v57 = vld [vmem:[#allocation5 + $0x8] sm:$0xff]
    %v58 = vld [vmem:[#allocation5 + $0x10] sm:$0xff]
    %v59 = vld [vmem:[#allocation5 + $0x18] sm:$0xff]
    %v60 = vld [vmem:[#allocation5 + $0x20] sm:$0xff]
    %v61 = vld [vmem:[#allocation5 + $0x28] sm:$0xff]
    %v62 = vld [vmem:[#allocation5 + $0x30] sm:$0xff]
    %v63 = vld [vmem:[#allocation5 + $0x38] sm:$0xff]
    %v64 = vld [vmem:[#allocation5 + $0x40] sm:$0xff]
    %v65 = vld [vmem:[#allocation5 + $0x48] sm:$0xff]
    %v66 = vld [vmem:[#allocation5 + $0x50] sm:$0xff]
    %v67 = vld [vmem:[#allocation5 + $0x58] sm:$0xff]
    %v68 = vld [vmem:[#allocation5 + $0x60] sm:$0xff]
    %v69 = vld [vmem:[#allocation5 + $0x68] sm:$0xff]
    %v70 = vld [vmem:[#allocation5 + $0x70] sm:$0xff]
    %v71 = vld [vmem:[#allocation5 + $0x78] sm:$0xff]
    %v72 = vld [vmem:[#allocation5 + $0x80] sm:$0xff]
    %v73 = vld [vmem:[#allocation5 + $0x88] sm:$0xff]
    %v74 = vld [vmem:[#allocation5 + $0x90] sm:$0xff]
    %v75 = vld [vmem:[#allocation5 + $0x98] sm:$0xff]
    %v76 = vld [vmem:[#allocation5 + $0xa0] sm:$0xff]
    %v77 = vld [vmem:[#allocation5 + $0xa8] sm:$0xff]
    %v78 = vld [vmem:[#allocation5 + $0xb0] sm:$0xff]
    %v79 = vld [vmem:[#allocation5 + $0xb8] sm:$0xff]
    %v80 = vld [vmem:[#allocation5 + $0xc0] sm:$0xff]
    %v81 = vld [vmem:[#allocation5 + $0xc8] sm:$0xff]
    %v82 = vld [vmem:[#allocation5 + $0xd0] sm:$0xff]
    %v83 = vld [vmem:[#allocation5 + $0xd8] sm:$0xff]
    %v84 = vld [vmem:[#allocation5 + $0xe0] sm:$0xff]
    %v85 = vld [vmem:[#allocation5 + $0xe8] sm:$0xff]
    %v86 = vld [vmem:[#allocation5 + $0xf0] sm:$0xff]
    %v87 = vld [vmem:[#allocation5 + $0xf8] sm:$0xff]
    %v88 = vunpack.c.l.bf16 %v56
    %v89 = vunpack.c.h.bf16 %v56
    %v90 = vunpack.c.l.bf16 %v57
    %v91 = vunpack.c.h.bf16 %v57
    %v92 = vunpack.c.l.bf16 %v58
    %v93 = vunpack.c.h.bf16 %v58
    %v94 = vunpack.c.l.bf16 %v59
    %v95 = vunpack.c.h.bf16 %v59
    %v96 = vunpack.c.l.bf16 %v60
    %v97 = vunpack.c.h.bf16 %v60
    %v98 = vunpack.c.l.bf16 %v61
    %v99 = vunpack.c.h.bf16 %v61
    %v100 = vunpack.c.l.bf16 %v62
    %v101 = vunpack.c.h.bf16 %v62
    %v102 = vunpack.c.l.bf16 %v63
    %v103 = vunpack.c.h.bf16 %v63
    %v104 = vunpack.c.l.bf16 %v64
    %v105 = vunpack.c.h.bf16 %v64
    %v106 = vunpack.c.l.bf16 %v65
    %v107 = vunpack.c.h.bf16 %v65
    %v108 = vunpack.c.l.bf16 %v66
    %v109 = vunpack.c.h.bf16 %v66
    %v110 = vunpack.c.l.bf16 %v67
    %v111 = vunpack.c.h.bf16 %v67
    %v112 = vunpack.c.l.bf16 %v68
    %v113 = vunpack.c.h.bf16 %v68
    %v114 = vunpack.c.l.bf16 %v69
    %v115 = vunpack.c.h.bf16 %v69
    %v116 = vunpack.c.l.bf16 %v70
    %v117 = vunpack.c.h.bf16 %v70
    %v118 = vunpack.c.l.bf16 %v71
    %v119 = vunpack.c.h.bf16 %v71
    %v120 = vunpack.c.l.bf16 %v72
    %v121 = vunpack.c.h.bf16 %v72
    %v122 = vunpack.c.l.bf16 %v73
    %v123 = vunpack.c.h.bf16 %v73
    %v124 = vunpack.c.l.bf16 %v74
    %v125 = vunpack.c.h.bf16 %v74
    %v126 = vunpack.c.l.bf16 %v75
    %v127 = vunpack.c.h.bf16 %v75
    %v128 = vunpack.c.l.bf16 %v76
    %v129 = vunpack.c.h.bf16 %v76
    %v130 = vunpack.c.l.bf16 %v77
    %v131 = vunpack.c.h.bf16 %v77
    %v132 = vunpack.c.l.bf16 %v78
    %v133 = vunpack.c.h.bf16 %v78
    %v134 = vunpack.c.l.bf16 %v79
    %v135 = vunpack.c.h.bf16 %v79
    %v136 = vunpack.c.l.bf16 %v80
    %v137 = vunpack.c.h.bf16 %v80
    %v138 = vunpack.c.l.bf16 %v81
    %v139 = vunpack.c.h.bf16 %v81
    %v140 = vunpack.c.l.bf16 %v82
    %v141 = vunpack.c.h.bf16 %v82
    %v142 = vunpack.c.l.bf16 %v83
    %v143 = vunpack.c.h.bf16 %v83
    %v144 = vunpack.c.l.bf16 %v84
    %v145 = vunpack.c.h.bf16 %v84
    %v146 = vunpack.c.l.bf16 %v85
    %v147 = vunpack.c.h.bf16 %v85
    %v148 = vunpack.c.l.bf16 %v86
    %v149 = vunpack.c.h.bf16 %v86
    %v150 = vunpack.c.l.bf16 %v87
    %v151 = vunpack.c.h.bf16 %v87
    %v152 = vld [vmem:[#allocation7] sm:$0x3]
    %v154 = vlaneseq
    %v155 = vshrl.u32 %v154, 7
    %v156 = vsub.s32 0, %v155
    %v157 = vrot.slane %v152, %v156
    %v158 = vlaneseq
    %v159 = vshrl.u32 %v158, 7
    %v160 = vsub.s32 1, %v159
    %v161 = vrot.slane %v152, %v160
    %164 = vmatprep.subr.mxu0 %v119
    %165 = vmatpush1.msra.mxu0 %v118
    %166 = vmatprep.subr.mxu0 %v117
    %167 = vmatpush1.msra.mxu0 %v116
    %168 = vmatprep.subr.mxu0 %v115
    %169 = vmatpush1.msra.mxu0 %v114
    %170 = vmatprep.subr.mxu0 %v113
    %171 = vmatpush1.msra.mxu0 %v112
    %172 = vmatprep.subr.mxu0 %v111
    %173 = vmatpush1.msra.mxu0 %v110
    %174 = vmatprep.subr.mxu0 %v109
    %175 = vmatpush1.msra.mxu0 %v108
    %176 = vmatprep.subr.mxu0 %v107
    %177 = vmatpush1.msra.mxu0 %v106
    %178 = vmatprep.subr.mxu0 %v105
    %179 = vmatpush1.msra.mxu0 %v104
    %180 = vmatprep.subr.mxu0 %v103
    %181 = vmatpush1.msra.mxu0 %v102
    %182 = vmatprep.subr.mxu0 %v101
    %183 = vmatpush1.msra.mxu0 %v100
    %184 = vmatprep.subr.mxu0 %v99
    %185 = vmatpush1.msra.mxu0 %v98
    %186 = vmatprep.subr.mxu0 %v97
    %187 = vmatpush1.msra.mxu0 %v96
    %188 = vmatprep.subr.mxu0 %v95
    %189 = vmatpush1.msra.mxu0 %v94
    %190 = vmatprep.subr.mxu0 %v93
    %191 = vmatpush1.msra.mxu0 %v92
    %192 = vmatprep.subr.mxu0 %v91
    %193 = vmatpush1.msra.mxu0 %v90
    %194 = vmatprep.subr.mxu0 %v89
    %195 = vmatpush1.msra.mxu0 %v88
    %196 = vmatprep.subr.mxu0 %v151
    %197 = vmatpush2.msra.mxu0 %v150
    %198 = vmatprep.subr.mxu0 %v149
    %199 = vmatpush2.msra.mxu0 %v148
    %200 = vmatprep.subr.mxu0 %v147
    %201 = vmatpush2.msra.mxu0 %v146
    %202 = vmatprep.subr.mxu0 %v145
    %203 = vmatpush2.msra.mxu0 %v144
    %204 = vmatprep.subr.mxu0 %v143
    %205 = vmatpush2.msra.mxu0 %v142
    %206 = vmatprep.subr.mxu0 %v141
    %207 = vmatpush2.msra.mxu0 %v140
    %208 = vmatprep.subr.mxu0 %v139
    %209 = vmatpush2.msra.mxu0 %v138
    %210 = vmatprep.subr.mxu0 %v137
    %211 = vmatpush2.msra.mxu0 %v136
    %212 = vmatprep.subr.mxu0 %v135
    %213 = vmatpush2.msra.mxu0 %v134
    %214 = vmatprep.subr.mxu0 %v133
    %215 = vmatpush2.msra.mxu0 %v132
    %216 = vmatprep.subr.mxu0 %v131
    %217 = vmatpush2.msra.mxu0 %v130
    %218 = vmatprep.subr.mxu0 %v129
    %219 = vmatpush2.msra.mxu0 %v128
    %220 = vmatprep.subr.mxu0 %v127
    %221 = vmatpush2.msra.mxu0 %v126
    %222 = vmatprep.subr.mxu0 %v125
    %223 = vmatpush2.msra.mxu0 %v124
    %224 = vmatprep.subr.mxu0 %v123
    %225 = vmatpush2.msra.mxu0 %v122
    %226 = vmatprep.subr.mxu0 %v121
    %227 = vmatpush2.msra.mxu0 %v120
    %228 = vmatprep.mubr.f32.mxu0 %v55
    %229 = vmatmul.mubr.f32.gmra.mxu0 %v54
    %v230 = vpop.f32.mrf.mxu0
    %v231 = vadd.f32 %v157, %v230
    %v232 = vpop.f32.mrf.mxu0
    %v233 = vadd.f32 %v161, %v232
    %234 = vdwg.mxu0
    %vm235 = vcmp.ge.f32.partialorder %v231, 0.0
    %vm236 = vcmp.ge.f32.partialorder %v233, 0.0
    %v237 = vmul.f32 %v231, 0.2
    %v238 = vmul.f32 %v233, 0.2
    %v239 = vsel %vm235, %v231, %v237
    %v240 = vsel %vm236, %v233, %v238
    %s241 = scalar_lea.vmem [#allocation5], 256
    %v242 = vld [vmem:[%s241] sm:$0xff]
    %v243 = vld [vmem:[%s241 + $0x8] sm:$0xff]
    %v244 = vld [vmem:[%s241 + $0x10] sm:$0xff]
    %v245 = vld [vmem:[%s241 + $0x18] sm:$0xff]
    %v246 = vld [vmem:[%s241 + $0x20] sm:$0xff]
    %v247 = vld [vmem:[%s241 + $0x28] sm:$0xff]
    %v248 = vld [vmem:[%s241 + $0x30] sm:$0xff]
    %v249 = vld [vmem:[%s241 + $0x38] sm:$0xff]
    %v250 = vld [vmem:[%s241 + $0x40] sm:$0xff]
    %v251 = vld [vmem:[%s241 + $0x48] sm:$0xff]
    %v252 = vld [vmem:[%s241 + $0x50] sm:$0xff]
    %v253 = vld [vmem:[%s241 + $0x58] sm:$0xff]
    %v254 = vld [vmem:[%s241 + $0x60] sm:$0xff]
    %v255 = vld [vmem:[%s241 + $0x68] sm:$0xff]
    %v256 = vld [vmem:[%s241 + $0x70] sm:$0xff]
    %v257 = vld [vmem:[%s241 + $0x78] sm:$0xff]
    %v258 = vld [vmem:[%s241 + $0x80] sm:$0xff]
    %v259 = vld [vmem:[%s241 + $0x88] sm:$0xff]
    %v260 = vld [vmem:[%s241 + $0x90] sm:$0xff]
    %v261 = vld [vmem:[%s241 + $0x98] sm:$0xff]
    %v262 = vld [vmem:[%s241 + $0xa0] sm:$0xff]
    %v263 = vld [vmem:[%s241 + $0xa8] sm:$0xff]
    %v264 = vld [vmem:[%s241 + $0xb0] sm:$0xff]
    %v265 = vld [vmem:[%s241 + $0xb8] sm:$0xff]
    %v266 = vld [vmem:[%s241 + $0xc0] sm:$0xff]
    %v267 = vld [vmem:[%s241 + $0xc8] sm:$0xff]
    %v268 = vld [vmem:[%s241 + $0xd0] sm:$0xff]
    %v269 = vld [vmem:[%s241 + $0xd8] sm:$0xff]
    %v270 = vld [vmem:[%s241 + $0xe0] sm:$0xff]
    %v271 = vld [vmem:[%s241 + $0xe8] sm:$0xff]
    %v272 = vld [vmem:[%s241 + $0xf0] sm:$0xff]
    %v273 = vld [vmem:[%s241 + $0xf8] sm:$0xff]
    %v274 = vunpack.c.l.bf16 %v242
    %v275 = vunpack.c.h.bf16 %v242
    %v276 = vunpack.c.l.bf16 %v243
    %v277 = vunpack.c.h.bf16 %v243
    %v278 = vunpack.c.l.bf16 %v244
    %v279 = vunpack.c.h.bf16 %v244
    %v280 = vunpack.c.l.bf16 %v245
    %v281 = vunpack.c.h.bf16 %v245
    %v282 = vunpack.c.l.bf16 %v246
    %v283 = vunpack.c.h.bf16 %v246
    %v284 = vunpack.c.l.bf16 %v247
    %v285 = vunpack.c.h.bf16 %v247
    %v286 = vunpack.c.l.bf16 %v248
    %v287 = vunpack.c.h.bf16 %v248
    %v288 = vunpack.c.l.bf16 %v249
    %v289 = vunpack.c.h.bf16 %v249
    %v290 = vunpack.c.l.bf16 %v250
    %v291 = vunpack.c.h.bf16 %v250
    %v292 = vunpack.c.l.bf16 %v251
    %v293 = vunpack.c.h.bf16 %v251
    %v294 = vunpack.c.l.bf16 %v252
    %v295 = vunpack.c.h.bf16 %v252
    %v296 = vunpack.c.l.bf16 %v253
    %v297 = vunpack.c.h.bf16 %v253
    %v298 = vunpack.c.l.bf16 %v254
    %v299 = vunpack.c.h.bf16 %v254
    %v300 = vunpack.c.l.bf16 %v255
    %v301 = vunpack.c.h.bf16 %v255
    %v302 = vunpack.c.l.bf16 %v256
    %v303 = vunpack.c.h.bf16 %v256
    %v304 = vunpack.c.l.bf16 %v257
    %v305 = vunpack.c.h.bf16 %v257
    %v306 = vunpack.c.l.bf16 %v258
    %v307 = vunpack.c.h.bf16 %v258
    %v308 = vunpack.c.l.bf16 %v259
    %v309 = vunpack.c.h.bf16 %v259
    %v310 = vunpack.c.l.bf16 %v260
    %v311 = vunpack.c.h.bf16 %v260
    %v312 = vunpack.c.l.bf16 %v261
    %v313 = vunpack.c.h.bf16 %v261
    %v314 = vunpack.c.l.bf16 %v262
    %v315 = vunpack.c.h.bf16 %v262
    %v316 = vunpack.c.l.bf16 %v263
    %v317 = vunpack.c.h.bf16 %v263
    %v318 = vunpack.c.l.bf16 %v264
    %v319 = vunpack.c.h.bf16 %v264
    %v320 = vunpack.c.l.bf16 %v265
    %v321 = vunpack.c.h.bf16 %v265
    %v322 = vunpack.c.l.bf16 %v266
    %v323 = vunpack.c.h.bf16 %v266
    %v324 = vunpack.c.l.bf16 %v267
    %v325 = vunpack.c.h.bf16 %v267
    %v326 = vunpack.c.l.bf16 %v268
    %v327 = vunpack.c.h.bf16 %v268
    %v328 = vunpack.c.l.bf16 %v269
    %v329 = vunpack.c.h.bf16 %v269
    %v330 = vunpack.c.l.bf16 %v270
    %v331 = vunpack.c.h.bf16 %v270
    %v332 = vunpack.c.l.bf16 %v271
    %v333 = vunpack.c.h.bf16 %v271
    %v334 = vunpack.c.l.bf16 %v272
    %v335 = vunpack.c.h.bf16 %v272
    %v336 = vunpack.c.l.bf16 %v273
    %v337 = vunpack.c.h.bf16 %v273
    %s338 = scalar_lea.vmem [#allocation7], 2
    %v339 = vld [vmem:[%s338] sm:$0x3]
    %v341 = vlaneseq
    %v342 = vshrl.u32 %v341, 7
    %v343 = vsub.s32 0, %v342
    %v344 = vrot.slane %v339, %v343
    %v345 = vlaneseq
    %v346 = vshrl.u32 %v345, 7
    %v347 = vsub.s32 1, %v346
    %v348 = vrot.slane %v339, %v347
    %351 = vmatprep.subr.mxu0 %v305
    %352 = vmatpush1.msra.mxu0 %v304
    %353 = vmatprep.subr.mxu0 %v303
    %354 = vmatpush1.msra.mxu0 %v302
    %355 = vmatprep.subr.mxu0 %v301
    %356 = vmatpush1.msra.mxu0 %v300
    %357 = vmatprep.subr.mxu0 %v299
    %358 = vmatpush1.msra.mxu0 %v298
    %359 = vmatprep.subr.mxu0 %v297
    %360 = vmatpush1.msra.mxu0 %v296
    %361 = vmatprep.subr.mxu0 %v295
    %362 = vmatpush1.msra.mxu0 %v294
    %363 = vmatprep.subr.mxu0 %v293
    %364 = vmatpush1.msra.mxu0 %v292
    %365 = vmatprep.subr.mxu0 %v291
    %366 = vmatpush1.msra.mxu0 %v290
    %367 = vmatprep.subr.mxu0 %v289
    %368 = vmatpush1.msra.mxu0 %v288
    %369 = vmatprep.subr.mxu0 %v287
    %370 = vmatpush1.msra.mxu0 %v286
    %371 = vmatprep.subr.mxu0 %v285
    %372 = vmatpush1.msra.mxu0 %v284
    %373 = vmatprep.subr.mxu0 %v283
    %374 = vmatpush1.msra.mxu0 %v282
    %375 = vmatprep.subr.mxu0 %v281
    %376 = vmatpush1.msra.mxu0 %v280
    %377 = vmatprep.subr.mxu0 %v279
    %378 = vmatpush1.msra.mxu0 %v278
    %379 = vmatprep.subr.mxu0 %v277
    %380 = vmatpush1.msra.mxu0 %v276
    %381 = vmatprep.subr.mxu0 %v275
    %382 = vmatpush1.msra.mxu0 %v274
    %383 = vmatprep.subr.mxu0 %v337
    %384 = vmatpush2.msra.mxu0 %v336
    %385 = vmatprep.subr.mxu0 %v335
    %386 = vmatpush2.msra.mxu0 %v334
    %387 = vmatprep.subr.mxu0 %v333
    %388 = vmatpush2.msra.mxu0 %v332
    %389 = vmatprep.subr.mxu0 %v331
    %390 = vmatpush2.msra.mxu0 %v330
    %391 = vmatprep.subr.mxu0 %v329
    %392 = vmatpush2.msra.mxu0 %v328
    %393 = vmatprep.subr.mxu0 %v327
    %394 = vmatpush2.msra.mxu0 %v326
    %395 = vmatprep.subr.mxu0 %v325
    %396 = vmatpush2.msra.mxu0 %v324
    %397 = vmatprep.subr.mxu0 %v323
    %398 = vmatpush2.msra.mxu0 %v322
    %399 = vmatprep.subr.mxu0 %v321
    %400 = vmatpush2.msra.mxu0 %v320
    %401 = vmatprep.subr.mxu0 %v319
    %402 = vmatpush2.msra.mxu0 %v318
    %403 = vmatprep.subr.mxu0 %v317
    %404 = vmatpush2.msra.mxu0 %v316
    %405 = vmatprep.subr.mxu0 %v315
    %406 = vmatpush2.msra.mxu0 %v314
    %407 = vmatprep.subr.mxu0 %v313
    %408 = vmatpush2.msra.mxu0 %v312
    %409 = vmatprep.subr.mxu0 %v311
    %410 = vmatpush2.msra.mxu0 %v310
    %411 = vmatprep.subr.mxu0 %v309
    %412 = vmatpush2.msra.mxu0 %v308
    %413 = vmatprep.subr.mxu0 %v307
    %414 = vmatpush2.msra.mxu0 %v306
    %415 = vmatprep.mubr.f32.mxu0 %v240
    %416 = vmatmul.mubr.f32.gmra.mxu0 %v239
    %v417 = vpop.f32.mrf.mxu0
    %v418 = vadd.f32 %v344, %v417
    %v419 = vpop.f32.mrf.mxu0
    %v420 = vadd.f32 %v348, %v419
    %421 = vdwg.mxu0
    %vm422 = vcmp.ge.f32.partialorder %v418, 0.0
    %vm423 = vcmp.ge.f32.partialorder %v420, 0.0
    %v424 = vmul.f32 %v418, 0.2
    %v425 = vmul.f32 %v420, 0.2
    %v426 = vsel %vm422, %v418, %v424
    %v427 = vsel %vm423, %v420, %v425
    %s428 = scalar_lea.vmem [#allocation5], 512
    %v429 = vld [vmem:[%s428] sm:$0xff]
    %v430 = vld [vmem:[%s428 + $0x8] sm:$0xff]
    %v431 = vld [vmem:[%s428 + $0x10] sm:$0xff]
    %v432 = vld [vmem:[%s428 + $0x18] sm:$0xff]
    %v433 = vld [vmem:[%s428 + $0x20] sm:$0xff]
    %v434 = vld [vmem:[%s428 + $0x28] sm:$0xff]
    %v435 = vld [vmem:[%s428 + $0x30] sm:$0xff]
    %v436 = vld [vmem:[%s428 + $0x38] sm:$0xff]
    %v437 = vld [vmem:[%s428 + $0x40] sm:$0xff]
    %v438 = vld [vmem:[%s428 + $0x48] sm:$0xff]
    %v439 = vld [vmem:[%s428 + $0x50] sm:$0xff]
    %v440 = vld [vmem:[%s428 + $0x58] sm:$0xff]
    %v441 = vld [vmem:[%s428 + $0x60] sm:$0xff]
    %v442 = vld [vmem:[%s428 + $0x68] sm:$0xff]
    %v443 = vld [vmem:[%s428 + $0x70] sm:$0xff]
    %v444 = vld [vmem:[%s428 + $0x78] sm:$0xff]
    %v445 = vld [vmem:[%s428 + $0x80] sm:$0xff]
    %v446 = vld [vmem:[%s428 + $0x88] sm:$0xff]
    %v447 = vld [vmem:[%s428 + $0x90] sm:$0xff]
    %v448 = vld [vmem:[%s428 + $0x98] sm:$0xff]
    %v449 = vld [vmem:[%s428 + $0xa0] sm:$0xff]
    %v450 = vld [vmem:[%s428 + $0xa8] sm:$0xff]
    %v451 = vld [vmem:[%s428 + $0xb0] sm:$0xff]
    %v452 = vld [vmem:[%s428 + $0xb8] sm:$0xff]
    %v453 = vld [vmem:[%s428 + $0xc0] sm:$0xff]
    %v454 = vld [vmem:[%s428 + $0xc8] sm:$0xff]
    %v455 = vld [vmem:[%s428 + $0xd0] sm:$0xff]
    %v456 = vld [vmem:[%s428 + $0xd8] sm:$0xff]
    %v457 = vld [vmem:[%s428 + $0xe0] sm:$0xff]
    %v458 = vld [vmem:[%s428 + $0xe8] sm:$0xff]
    %v459 = vld [vmem:[%s428 + $0xf0] sm:$0xff]
    %v460 = vld [vmem:[%s428 + $0xf8] sm:$0xff]
    %v461 = vunpack.c.l.bf16 %v429
    %v462 = vunpack.c.h.bf16 %v429
    %v463 = vunpack.c.l.bf16 %v430
    %v464 = vunpack.c.h.bf16 %v430
    %v465 = vunpack.c.l.bf16 %v431
    %v466 = vunpack.c.h.bf16 %v431
    %v467 = vunpack.c.l.bf16 %v432
    %v468 = vunpack.c.h.bf16 %v432
    %v469 = vunpack.c.l.bf16 %v433
    %v470 = vunpack.c.h.bf16 %v433
    %v471 = vunpack.c.l.bf16 %v434
    %v472 = vunpack.c.h.bf16 %v434
    %v473 = vunpack.c.l.bf16 %v435
    %v474 = vunpack.c.h.bf16 %v435
    %v475 = vunpack.c.l.bf16 %v436
    %v476 = vunpack.c.h.bf16 %v436
    %v477 = vunpack.c.l.bf16 %v437
    %v478 = vunpack.c.h.bf16 %v437
    %v479 = vunpack.c.l.bf16 %v438
    %v480 = vunpack.c.h.bf16 %v438
    %v481 = vunpack.c.l.bf16 %v439
    %v482 = vunpack.c.h.bf16 %v439
    %v483 = vunpack.c.l.bf16 %v440
    %v484 = vunpack.c.h.bf16 %v440
    %v485 = vunpack.c.l.bf16 %v441
    %v486 = vunpack.c.h.bf16 %v441
    %v487 = vunpack.c.l.bf16 %v442
    %v488 = vunpack.c.h.bf16 %v442
    %v489 = vunpack.c.l.bf16 %v443
    %v490 = vunpack.c.h.bf16 %v443
    %v491 = vunpack.c.l.bf16 %v444
    %v492 = vunpack.c.h.bf16 %v444
    %v493 = vunpack.c.l.bf16 %v445
    %v494 = vunpack.c.h.bf16 %v445
    %v495 = vunpack.c.l.bf16 %v446
    %v496 = vunpack.c.h.bf16 %v446
    %v497 = vunpack.c.l.bf16 %v447
    %v498 = vunpack.c.h.bf16 %v447
    %v499 = vunpack.c.l.bf16 %v448
    %v500 = vunpack.c.h.bf16 %v448
    %v501 = vunpack.c.l.bf16 %v449
    %v502 = vunpack.c.h.bf16 %v449
    %v503 = vunpack.c.l.bf16 %v450
    %v504 = vunpack.c.h.bf16 %v450
    %v505 = vunpack.c.l.bf16 %v451
    %v506 = vunpack.c.h.bf16 %v451
    %v507 = vunpack.c.l.bf16 %v452
    %v508 = vunpack.c.h.bf16 %v452
    %v509 = vunpack.c.l.bf16 %v453
    %v510 = vunpack.c.h.bf16 %v453
    %v511 = vunpack.c.l.bf16 %v454
    %v512 = vunpack.c.h.bf16 %v454
    %v513 = vunpack.c.l.bf16 %v455
    %v514 = vunpack.c.h.bf16 %v455
    %v515 = vunpack.c.l.bf16 %v456
    %v516 = vunpack.c.h.bf16 %v456
    %v517 = vunpack.c.l.bf16 %v457
    %v518 = vunpack.c.h.bf16 %v457
    %v519 = vunpack.c.l.bf16 %v458
    %v520 = vunpack.c.h.bf16 %v458
    %v521 = vunpack.c.l.bf16 %v459
    %v522 = vunpack.c.h.bf16 %v459
    %v523 = vunpack.c.l.bf16 %v460
    %v524 = vunpack.c.h.bf16 %v460
    %s525 = scalar_lea.vmem [#allocation7], 4
    %v526 = vld [vmem:[%s525] sm:$0x3]
    %v528 = vlaneseq
    %v529 = vshrl.u32 %v528, 7
    %v530 = vsub.s32 0, %v529
    %v531 = vrot.slane %v526, %v530
    %v532 = vlaneseq
    %v533 = vshrl.u32 %v532, 7
    %v534 = vsub.s32 1, %v533
    %v535 = vrot.slane %v526, %v534
    %538 = vmatprep.subr.mxu0 %v492
    %539 = vmatpush1.msra.mxu0 %v491
    %540 = vmatprep.subr.mxu0 %v490
    %541 = vmatpush1.msra.mxu0 %v489
    %542 = vmatprep.subr.mxu0 %v488
    %543 = vmatpush1.msra.mxu0 %v487
    %544 = vmatprep.subr.mxu0 %v486
    %545 = vmatpush1.msra.mxu0 %v485
    %546 = vmatprep.subr.mxu0 %v484
    %547 = vmatpush1.msra.mxu0 %v483
    %548 = vmatprep.subr.mxu0 %v482
    %549 = vmatpush1.msra.mxu0 %v481
    %550 = vmatprep.subr.mxu0 %v480
    %551 = vmatpush1.msra.mxu0 %v479
    %552 = vmatprep.subr.mxu0 %v478
    %553 = vmatpush1.msra.mxu0 %v477
    %554 = vmatprep.subr.mxu0 %v476
    %555 = vmatpush1.msra.mxu0 %v475
    %556 = vmatprep.subr.mxu0 %v474
    %557 = vmatpush1.msra.mxu0 %v473
    %558 = vmatprep.subr.mxu0 %v472
    %559 = vmatpush1.msra.mxu0 %v471
    %560 = vmatprep.subr.mxu0 %v470
    %561 = vmatpush1.msra.mxu0 %v469
    %562 = vmatprep.subr.mxu0 %v468
    %563 = vmatpush1.msra.mxu0 %v467
    %564 = vmatprep.subr.mxu0 %v466
    %565 = vmatpush1.msra.mxu0 %v465
    %566 = vmatprep.subr.mxu0 %v464
    %567 = vmatpush1.msra.mxu0 %v463
    %568 = vmatprep.subr.mxu0 %v462
    %569 = vmatpush1.msra.mxu0 %v461
    %570 = vmatprep.subr.mxu0 %v524
    %571 = vmatpush2.msra.mxu0 %v523
    %572 = vmatprep.subr.mxu0 %v522
    %573 = vmatpush2.msra.mxu0 %v521
    %574 = vmatprep.subr.mxu0 %v520
    %575 = vmatpush2.msra.mxu0 %v519
    %576 = vmatprep.subr.mxu0 %v518
    %577 = vmatpush2.msra.mxu0 %v517
    %578 = vmatprep.subr.mxu0 %v516
    %579 = vmatpush2.msra.mxu0 %v515
    %580 = vmatprep.subr.mxu0 %v514
    %581 = vmatpush2.msra.mxu0 %v513
    %582 = vmatprep.subr.mxu0 %v512
    %583 = vmatpush2.msra.mxu0 %v511
    %584 = vmatprep.subr.mxu0 %v510
    %585 = vmatpush2.msra.mxu0 %v509
    %586 = vmatprep.subr.mxu0 %v508
    %587 = vmatpush2.msra.mxu0 %v507
    %588 = vmatprep.subr.mxu0 %v506
    %589 = vmatpush2.msra.mxu0 %v505
    %590 = vmatprep.subr.mxu0 %v504
    %591 = vmatpush2.msra.mxu0 %v503
    %592 = vmatprep.subr.mxu0 %v502
    %593 = vmatpush2.msra.mxu0 %v501
    %594 = vmatprep.subr.mxu0 %v500
    %595 = vmatpush2.msra.mxu0 %v499
    %596 = vmatprep.subr.mxu0 %v498
    %597 = vmatpush2.msra.mxu0 %v497
    %598 = vmatprep.subr.mxu0 %v496
    %599 = vmatpush2.msra.mxu0 %v495
    %600 = vmatprep.subr.mxu0 %v494
    %601 = vmatpush2.msra.mxu0 %v493
    %602 = vmatprep.mubr.f32.mxu0 %v427
    %603 = vmatmul.mubr.f32.gmra.mxu0 %v426
    %v604 = vpop.f32.mrf.mxu0
    %v605 = vadd.f32 %v531, %v604
    %v606 = vpop.f32.mrf.mxu0
    %v607 = vadd.f32 %v535, %v606
    %608 = vdwg.mxu0
    %vm609 = vcmp.ge.f32.partialorder %v605, 0.0
    %vm610 = vcmp.ge.f32.partialorder %v607, 0.0
    %v611 = vmul.f32 %v605, 0.2
    %v612 = vmul.f32 %v607, 0.2
    %v613 = vsel %vm609, %v605, %v611
    %v614 = vsel %vm610, %v607, %v612
    %s615 = scalar_lea.vmem [#allocation5], 768
    %v616 = vld [vmem:[%s615] sm:$0xff]
    %v617 = vld [vmem:[%s615 + $0x8] sm:$0xff]
    %v618 = vld [vmem:[%s615 + $0x10] sm:$0xff]
    %v619 = vld [vmem:[%s615 + $0x18] sm:$0xff]
    %v620 = vld [vmem:[%s615 + $0x20] sm:$0xff]
    %v621 = vld [vmem:[%s615 + $0x28] sm:$0xff]
    %v622 = vld [vmem:[%s615 + $0x30] sm:$0xff]
    %v623 = vld [vmem:[%s615 + $0x38] sm:$0xff]
    %v624 = vld [vmem:[%s615 + $0x40] sm:$0xff]
    %v625 = vld [vmem:[%s615 + $0x48] sm:$0xff]
    %v626 = vld [vmem:[%s615 + $0x50] sm:$0xff]
    %v627 = vld [vmem:[%s615 + $0x58] sm:$0xff]
    %v628 = vld [vmem:[%s615 + $0x60] sm:$0xff]
    %v629 = vld [vmem:[%s615 + $0x68] sm:$0xff]
    %v630 = vld [vmem:[%s615 + $0x70] sm:$0xff]
    %v631 = vld [vmem:[%s615 + $0x78] sm:$0xff]
    %v632 = vld [vmem:[%s615 + $0x80] sm:$0xff]
    %v633 = vld [vmem:[%s615 + $0x88] sm:$0xff]
    %v634 = vld [vmem:[%s615 + $0x90] sm:$0xff]
    %v635 = vld [vmem:[%s615 + $0x98] sm:$0xff]
    %v636 = vld [vmem:[%s615 + $0xa0] sm:$0xff]
    %v637 = vld [vmem:[%s615 + $0xa8] sm:$0xff]
    %v638 = vld [vmem:[%s615 + $0xb0] sm:$0xff]
    %v639 = vld [vmem:[%s615 + $0xb8] sm:$0xff]
    %v640 = vld [vmem:[%s615 + $0xc0] sm:$0xff]
    %v641 = vld [vmem:[%s615 + $0xc8] sm:$0xff]
    %v642 = vld [vmem:[%s615 + $0xd0] sm:$0xff]
    %v643 = vld [vmem:[%s615 + $0xd8] sm:$0xff]
    %v644 = vld [vmem:[%s615 + $0xe0] sm:$0xff]
    %v645 = vld [vmem:[%s615 + $0xe8] sm:$0xff]
    %v646 = vld [vmem:[%s615 + $0xf0] sm:$0xff]
    %v647 = vld [vmem:[%s615 + $0xf8] sm:$0xff]
    %v648 = vunpack.c.l.bf16 %v616
    %v649 = vunpack.c.h.bf16 %v616
    %v650 = vunpack.c.l.bf16 %v617
    %v651 = vunpack.c.h.bf16 %v617
    %v652 = vunpack.c.l.bf16 %v618
    %v653 = vunpack.c.h.bf16 %v618
    %v654 = vunpack.c.l.bf16 %v619
    %v655 = vunpack.c.h.bf16 %v619
    %v656 = vunpack.c.l.bf16 %v620
    %v657 = vunpack.c.h.bf16 %v620
    %v658 = vunpack.c.l.bf16 %v621
    %v659 = vunpack.c.h.bf16 %v621
    %v660 = vunpack.c.l.bf16 %v622
    %v661 = vunpack.c.h.bf16 %v622
    %v662 = vunpack.c.l.bf16 %v623
    %v663 = vunpack.c.h.bf16 %v623
    %v664 = vunpack.c.l.bf16 %v624
    %v665 = vunpack.c.h.bf16 %v624
    %v666 = vunpack.c.l.bf16 %v625
    %v667 = vunpack.c.h.bf16 %v625
    %v668 = vunpack.c.l.bf16 %v626
    %v669 = vunpack.c.h.bf16 %v626
    %v670 = vunpack.c.l.bf16 %v627
    %v671 = vunpack.c.h.bf16 %v627
    %v672 = vunpack.c.l.bf16 %v628
    %v673 = vunpack.c.h.bf16 %v628
    %v674 = vunpack.c.l.bf16 %v629
    %v675 = vunpack.c.h.bf16 %v629
    %v676 = vunpack.c.l.bf16 %v630
    %v677 = vunpack.c.h.bf16 %v630
    %v678 = vunpack.c.l.bf16 %v631
    %v679 = vunpack.c.h.bf16 %v631
    %v680 = vunpack.c.l.bf16 %v632
    %v681 = vunpack.c.h.bf16 %v632
    %v682 = vunpack.c.l.bf16 %v633
    %v683 = vunpack.c.h.bf16 %v633
    %v684 = vunpack.c.l.bf16 %v634
    %v685 = vunpack.c.h.bf16 %v634
    %v686 = vunpack.c.l.bf16 %v635
    %v687 = vunpack.c.h.bf16 %v635
    %v688 = vunpack.c.l.bf16 %v636
    %v689 = vunpack.c.h.bf16 %v636
    %v690 = vunpack.c.l.bf16 %v637
    %v691 = vunpack.c.h.bf16 %v637
    %v692 = vunpack.c.l.bf16 %v638
    %v693 = vunpack.c.h.bf16 %v638
    %v694 = vunpack.c.l.bf16 %v639
    %v695 = vunpack.c.h.bf16 %v639
    %v696 = vunpack.c.l.bf16 %v640
    %v697 = vunpack.c.h.bf16 %v640
    %v698 = vunpack.c.l.bf16 %v641
    %v699 = vunpack.c.h.bf16 %v641
    %v700 = vunpack.c.l.bf16 %v642
    %v701 = vunpack.c.h.bf16 %v642
    %v702 = vunpack.c.l.bf16 %v643
    %v703 = vunpack.c.h.bf16 %v643
    %v704 = vunpack.c.l.bf16 %v644
    %v705 = vunpack.c.h.bf16 %v644
    %v706 = vunpack.c.l.bf16 %v645
    %v707 = vunpack.c.h.bf16 %v645
    %v708 = vunpack.c.l.bf16 %v646
    %v709 = vunpack.c.h.bf16 %v646
    %v710 = vunpack.c.l.bf16 %v647
    %v711 = vunpack.c.h.bf16 %v647
    %s712 = scalar_lea.vmem [#allocation7], 6
    %v713 = vld [vmem:[%s712] sm:$0x3]
    %v715 = vlaneseq
    %v716 = vshrl.u32 %v715, 7
    %v717 = vsub.s32 0, %v716
    %v718 = vrot.slane %v713, %v717
    %v719 = vlaneseq
    %v720 = vshrl.u32 %v719, 7
    %v721 = vsub.s32 1, %v720
    %v722 = vrot.slane %v713, %v721
    %725 = vmatprep.subr.mxu0 %v679
    %726 = vmatpush1.msra.mxu0 %v678
    %727 = vmatprep.subr.mxu0 %v677
    %728 = vmatpush1.msra.mxu0 %v676
    %729 = vmatprep.subr.mxu0 %v675
    %730 = vmatpush1.msra.mxu0 %v674
    %731 = vmatprep.subr.mxu0 %v673
    %732 = vmatpush1.msra.mxu0 %v672
    %733 = vmatprep.subr.mxu0 %v671
    %734 = vmatpush1.msra.mxu0 %v670
    %735 = vmatprep.subr.mxu0 %v669
    %736 = vmatpush1.msra.mxu0 %v668
    %737 = vmatprep.subr.mxu0 %v667
    %738 = vmatpush1.msra.mxu0 %v666
    %739 = vmatprep.subr.mxu0 %v665
    %740 = vmatpush1.msra.mxu0 %v664
    %741 = vmatprep.subr.mxu0 %v663
    %742 = vmatpush1.msra.mxu0 %v662
    %743 = vmatprep.subr.mxu0 %v661
    %744 = vmatpush1.msra.mxu0 %v660
    %745 = vmatprep.subr.mxu0 %v659
    %746 = vmatpush1.msra.mxu0 %v658
    %747 = vmatprep.subr.mxu0 %v657
    %748 = vmatpush1.msra.mxu0 %v656
    %749 = vmatprep.subr.mxu0 %v655
    %750 = vmatpush1.msra.mxu0 %v654
    %751 = vmatprep.subr.mxu0 %v653
    %752 = vmatpush1.msra.mxu0 %v652
    %753 = vmatprep.subr.mxu0 %v651
    %754 = vmatpush1.msra.mxu0 %v650
    %755 = vmatprep.subr.mxu0 %v649
    %756 = vmatpush1.msra.mxu0 %v648
    %757 = vmatprep.subr.mxu0 %v711
    %758 = vmatpush2.msra.mxu0 %v710
    %759 = vmatprep.subr.mxu0 %v709
    %760 = vmatpush2.msra.mxu0 %v708
    %761 = vmatprep.subr.mxu0 %v707
    %762 = vmatpush2.msra.mxu0 %v706
    %763 = vmatprep.subr.mxu0 %v705
    %764 = vmatpush2.msra.mxu0 %v704
    %765 = vmatprep.subr.mxu0 %v703
    %766 = vmatpush2.msra.mxu0 %v702
    %767 = vmatprep.subr.mxu0 %v701
    %768 = vmatpush2.msra.mxu0 %v700
    %769 = vmatprep.subr.mxu0 %v699
    %770 = vmatpush2.msra.mxu0 %v698
    %771 = vmatprep.subr.mxu0 %v697
    %772 = vmatpush2.msra.mxu0 %v696
    %773 = vmatprep.subr.mxu0 %v695
    %774 = vmatpush2.msra.mxu0 %v694
    %775 = vmatprep.subr.mxu0 %v693
    %776 = vmatpush2.msra.mxu0 %v692
    %777 = vmatprep.subr.mxu0 %v691
    %778 = vmatpush2.msra.mxu0 %v690
    %779 = vmatprep.subr.mxu0 %v689
    %780 = vmatpush2.msra.mxu0 %v688
    %781 = vmatprep.subr.mxu0 %v687
    %782 = vmatpush2.msra.mxu0 %v686
    %783 = vmatprep.subr.mxu0 %v685
    %784 = vmatpush2.msra.mxu0 %v684
    %785 = vmatprep.subr.mxu0 %v683
    %786 = vmatpush2.msra.mxu0 %v682
    %787 = vmatprep.subr.mxu0 %v681
    %788 = vmatpush2.msra.mxu0 %v680
    %789 = vmatprep.mubr.f32.mxu0 %v614
    %790 = vmatmul.mubr.f32.gmra.mxu0 %v613
    %v791 = vpop.f32.mrf.mxu0
    %v792 = vadd.f32 %v718, %v791
    %v793 = vpop.f32.mrf.mxu0
    %v794 = vadd.f32 %v722, %v793
    %795 = vdwg.mxu0
    %vm796 = vcmp.ge.f32.partialorder %v792, 0.0
    %vm797 = vcmp.ge.f32.partialorder %v794, 0.0
    %v798 = vmul.f32 %v792, 0.2
    %v799 = vmul.f32 %v794, 0.2
    %v800 = vsel %vm796, %v792, %v798
    %v801 = vsel %vm797, %v794, %v799
    %802 = vst [vmem:[#allocation8] sm:$0xff] %v800
    %803 = vst [vmem:[#allocation8 + $0x8] sm:$0xff] %v801
    // Predicated region
    $region26: #{mapping_layer_forward.1} parent=1 // pred_check
      _
    $region27: #{mapping_layer_forward.1} parent=1 // pred_check_branch
      %805 = sbr.rel (0) target = $region29
    $region28: #{mapping_layer_forward.1} parent=1 // pred_region
      %s807 = ssub.s32 256, 256
      %808 = vsyncadd [#allocation4], %s807
      %s810 = sshll.u32 [#allocation8], 4
      %s811 = int_to_ptr.vmem [resolvable:$true] %s810
      %813 = dma.vmem_to_hbm [thread:$0]  %s811, 256, %s3, [#allocation4]
    $region29: #{mapping_layer_forward.1} parent=1 // pred_fallthru
      _
    // Predicated region
    $region30: #{mapping_layer_forward.1} parent=1 // pred_check
      _
    $region31: #{mapping_layer_forward.1} parent=1 // pred_check_branch
      %815 = sbr.rel (0) target = $region33
    $region32: #{mapping_layer_forward.1} parent=1 // pred_region
      %816 = dma.done [#allocation4], 256
    $region33: #{mapping_layer_forward.1} parent=1 // pred_fallthru
      _
    %817 = vsyncpa [#allocation3], 1
    %818 = vsyncpa [#allocation6], 1
    %819 = vsyncpa [#allocation4], 1

</llo_original>
